<compile_context>
chip_gen: v7x
topology: tpu7x:2x2x1
jax: 0.10.0
libtpu: 0.0.40
codegen_flags: <defaults>
</compile_context>

<pallas_src>
import functools

import jax
import jax.numpy as jnp
from jax.experimental import pallas as pl
from jax.experimental.pallas import tpu as pltpu


_MIN_GRID_STEPS = 8  # keep the pipeline + megacore fed


def _sublane_multiple(dtype) -> int:
    # f32 -> 8, bf16/f16 -> 16, int8/fp8 -> 32 (sub-32-bit packs along sublanes).
    itemsize = jnp.dtype(dtype).itemsize
    return max(8, 32 // itemsize)


@functools.lru_cache(maxsize=1)
def _vmem_budgets() -> tuple[int, int]:
    """Returns (block_vmem_budget_bytes, vmem_limit_bytes), generation-aware."""
    try:
        cap = int(pltpu.get_tpu_info().vmem_capacity_bytes)
    except Exception:
        cap = 64 * 1024 * 1024  # assume the smallest (v7x-like) part
    if cap >= 128 * 1024 * 1024:
        # v5e / v6e: 128 MiB physical VMEM — use bigger resident tiles.
        return 48 * 1024 * 1024, 64 * 1024 * 1024
    # v7x (64 MiB per TC) or unknown: stay conservative.
    return 20 * 1024 * 1024, 32 * 1024 * 1024


def _rmsnorm_kernel(x_ref, w_ref, o_ref, *, eps: float, fuse_casts: bool):
    # x_ref: (tile_rows, dim), w_ref: (1, dim), o_ref: (tile_rows, dim)
    w = w_ref[...]                                           # read weight once
    x_f32 = x_ref[...].astype(jnp.float32)                  # x.float()
    ms = jnp.mean(x_f32 * x_f32, axis=-1, keepdims=True)    # x.pow(2).mean(-1, keepdim=True)
    inv = jax.lax.rsqrt(ms + eps)                            # torch.rsqrt(... + eps)  (EUP)
    if fuse_casts:
        # Fast path (not bit-exact): keep everything in f32, single final cast.
        o_ref[...] = (x_f32 * inv * w.astype(jnp.float32)).astype(o_ref.dtype)
    else:
        # Bit-faithful: cast back to x.dtype BEFORE the weight multiply to match
        # the PyTorch `.type_as(x)` -> `* self.weight` ordering.
        normed = (x_f32 * inv).astype(x_ref.dtype)
        o_ref[...] = (normed * w).astype(o_ref.dtype)


def _pick_tile_rows(n_rows: int, dim: int, in_dtype, out_dtype) -> int:
    sub = max(_sublane_multiple(in_dtype), _sublane_multiple(out_dtype))
    in_b = jnp.dtype(in_dtype).itemsize
    out_b = jnp.dtype(out_dtype).itemsize
    # Per row: double-buffered pipelined input + output blocks ...
    pipelined_bytes = 2 * dim * (in_b + out_b)
    # ... plus the in-kernel f32 working set (x_f32 + one elementwise temp),
    # which lives alongside a single block and was previously unbudgeted.
    working_bytes = 2 * dim * 4
    block_budget, _ = _vmem_budgets()
    cap = max(sub, block_budget // (pipelined_bytes + working_bytes))

    # Keep at least ~_MIN_GRID_STEPS grid steps when the input is big enough:
    # a 1-block grid has nothing to pipeline and idles one v7x TensorCore.
    if n_rows >= _MIN_GRID_STEPS * sub:
        steps_cap = max(sub, (n_rows // _MIN_GRID_STEPS // sub) * sub)
        cap = min(cap, steps_cap)

    tile_rows = min(cap, n_rows)
    tile_rows = (tile_rows // sub) * sub
    if tile_rows == 0:
        # Fewer rows than one sublane group: a block dim equal to the full
        # array extent is always legal, so just take everything.
        tile_rows = n_rows
    return tile_rows


def rmsnorm(
    x: jax.Array,
    weight: jax.Array,
    eps: float,
    *,
    tile_rows: int | None = None,
    fuse_casts: bool = False,
) -> jax.Array:
    """RMSNorm over the last axis of x, scaled by `weight` (shape (dim,)).

    fuse_casts=True enables a faster, not-bit-exact path (single f32 pipeline,
    one final cast) — useful on v7x where the VALU cast chain, not HBM, binds
    for bf16 I/O.  Default (False) matches the PyTorch module bit-for-bit.
    """
    orig_shape = x.shape
    dim = orig_shape[-1]
    assert weight.shape == (dim,)
    # Perf note: dim should be a multiple of 128 (lane width) to avoid masked
    # vst.msk partial stores on the output path.

    # Flatten leading dims into rows; dim stays on the lane axis.
    x2 = x.reshape(-1, dim)
    n_rows = x2.shape[0]
    w2 = weight.reshape(1, dim)

    # Matches torch promotion of `output * self.weight`.
    out_dtype = jnp.result_type(x.dtype, weight.dtype)

    if tile_rows is None:
        tile_rows = _pick_tile_rows(n_rows, dim, x.dtype, out_dtype)
    else:
        sub = max(_sublane_multiple(x.dtype), _sublane_multiple(out_dtype))
        tile_rows = max(sub, (tile_rows // sub) * sub)
        tile_rows = min(tile_rows, max(n_rows, 1))

    # No padding copy: Pallas handles the partial last block (rows are
    # independent, so garbage rows in a partial block never reach HBM).
    grid = (pl.cdiv(n_rows, tile_rows),)

    _, vmem_limit = _vmem_budgets()
    kernel = functools.partial(_rmsnorm_kernel, eps=eps, fuse_casts=fuse_casts)

    out = pl.pallas_call(
        kernel,
        out_shape=jax.ShapeDtypeStruct((n_rows, dim), out_dtype),
        grid_spec=pltpu.PrefetchScalarGridSpec(
            num_scalar_prefetch=0,
            grid=grid,
            in_specs=[
                pl.BlockSpec((tile_rows, dim), lambda i: (i, 0)),
                # Constant index_map: the (1, dim) weight block stays resident
                # instead of being re-DMA'd each step.
                pl.BlockSpec((1, dim), lambda i: (0, 0)),
            ],
            out_specs=pl.BlockSpec((tile_rows, dim), lambda i: (i, 0)),
        ),
        compiler_params=pltpu.CompilerParams(
            dimension_semantics=("parallel",),
            vmem_limit_bytes=vmem_limit,
        ),
    )(x2, w2)

    return out.reshape(orig_shape)


def rmsnorm_ref(x, weight, eps):
    xf = x.astype(jnp.float32)
    inv = jax.lax.rsqrt(jnp.mean(xf * xf, axis=-1, keepdims=True) + eps)
    return (xf * inv).astype(x.dtype) * weight


if __name__ == "__main__":
    key = jax.random.PRNGKey(0)
    eps = 1e-6

    # Primary small test matching the module's forward: (batch, seq, dim).
    batch, seq, dim = 2, 8, 32
    x = jax.random.normal(key, (batch, seq, dim), dtype=jnp.float32)
    weight = jnp.ones((dim,), dtype=jnp.float32)  # nn.Parameter(torch.ones(dim))

    y = jax.block_until_ready(rmsnorm(x, weight, eps))
    y_ref = rmsnorm_ref(x, weight, eps)
    assert y.shape == x.shape and y.dtype == y_ref.dtype
    assert jnp.allclose(y, y_ref, atol=1e-5, rtol=1e-5)

    # Ragged row count (exercises the partial last block, no padding copy).
    key2 = jax.random.PRNGKey(1)
    x2 = jax.random.normal(key2, (3, 5, dim), dtype=jnp.float32)
    y2 = jax.block_until_ready(rmsnorm(x2, weight, eps))
    y2_ref = rmsnorm_ref(x2, weight, eps)
    assert y2.shape == x2.shape
    assert jnp.allclose(y2, y2_ref, atol=1e-5, rtol=1e-5)

    # Narrow-dtype path (bf16 in, f32 weight) + fused fast path compile check.
    key3 = jax.random.PRNGKey(2)
    x3 = jax.random.normal(key3, (2, 16, dim), dtype=jnp.bfloat16)
    y3 = jax.block_until_ready(rmsnorm(x3, weight, eps))
    y3_ref = rmsnorm_ref(x3, weight, eps)
    assert y3.dtype == y3_ref.dtype
    assert jnp.allclose(y3.astype(jnp.float32), y3_ref.astype(jnp.float32),
                        atol=2e-2, rtol=2e-2)
    y3f = jax.block_until_ready(rmsnorm(x3, weight, eps, fuse_casts=True))
    assert jnp.allclose(y3f.astype(jnp.float32), y3_ref.astype(jnp.float32),
                        atol=2e-2, rtol=2e-2)

    print("KERNEL_OK")
</pallas_src>

<mosaic_0001>
module attributes {stable_mosaic.version = 11 : i64} {
  func.func @_rmsnorm_kernel(%arg0: i32, %arg1: memref<16x32xf32, #tpu.memory_space<vmem>>, %arg2: memref<1x32xf32, #tpu.memory_space<vmem>>, %arg3: memref<16x32xf32, #tpu.memory_space<vmem>>) attributes {dimension_semantics = [#tpu.dimension_semantics<parallel>], iteration_bounds = array<i64: 1>, scalar_prefetch = 0 : i64, scratch_operands = 0 : i64, tpu.core_type = #tpu.core_type<tc>, window_params = [{transform_indices = @transform_0, window_bounds = array<i64: 16, 32>}, {pipeline_mode = #tpu.pipeline_mode<synchronous>, transform_indices = @transform_1, window_bounds = array<i64: 1, 32>}, {transform_indices = @transform_2, window_bounds = array<i64: 16, 32>}]} {
    %c0 = arith.constant 0 : index
    %c0_0 = arith.constant 0 : index
    %0 = vector.load %arg2[%c0, %c0_0] : memref<1x32xf32, #tpu.memory_space<vmem>>, vector<1x32xf32>
    %c0_1 = arith.constant 0 : index
    %c0_2 = arith.constant 0 : index
    %1 = vector.load %arg1[%c0_1, %c0_2] : memref<16x32xf32, #tpu.memory_space<vmem>>, vector<16x32xf32>
    %2 = arith.mulf %1, %1 : vector<16x32xf32>
    %cst = arith.constant dense<0.000000e+00> : vector<16xf32>
    %3 = vector.multi_reduction <add>, %2, %cst [1] : vector<16x32xf32> to vector<16xf32>
    %4 = vector.shape_cast %3 : vector<16xf32> to vector<16x1xf32>
    %cst_3 = arith.constant 3.200000e+01 : f32
    %5 = vector.broadcast %cst_3 : f32 to vector<16x1xf32>
    %6 = arith.divf %4, %5 : vector<16x1xf32>
    %cst_4 = arith.constant 9.99999997E-7 : f32
    %7 = vector.broadcast %cst_4 : f32 to vector<16x1xf32>
    %8 = arith.addf %6, %7 : vector<16x1xf32>
    %9 = math.rsqrt %8 : vector<16x1xf32>
    %10 = vector.broadcast %9 : vector<16x1xf32> to vector<16x32xf32>
    %11 = arith.mulf %1, %10 : vector<16x32xf32>
    %12 = vector.broadcast %0 : vector<1x32xf32> to vector<16x32xf32>
    %13 = arith.mulf %11, %12 : vector<16x32xf32>
    %c0_5 = arith.constant 0 : index
    %c0_6 = arith.constant 0 : index
    %14 = vector.load %arg3[%c0_5, %c0_6] : memref<16x32xf32, #tpu.memory_space<vmem>>, vector<16x32xf32>
    tpu.vector_store %arg3[%c0_5, %c0_6], %13 {strides = array<i32>} : memref<16x32xf32, #tpu.memory_space<vmem>>, vector<16x32xf32>,
    return
  }
  func.func @transform_0(%arg0: i32) -> (i32, i32) {
    %c0_i32 = arith.constant 0 : i32
    %c0_i32_0 = arith.constant 0 : i32
    return %arg0, %c0_i32 : i32, i32
  }
  func.func @transform_1(%arg0: i32) -> (i32, i32) {
    %c0_i32 = arith.constant 0 : i32
    %c0_i32_0 = arith.constant 0 : i32
    %c0_i32_1 = arith.constant 0 : i32
    return %c0_i32, %c0_i32_0 : i32, i32
  }
  func.func @transform_2(%arg0: i32) -> (i32, i32) {
    %c0_i32 = arith.constant 0 : i32
    %c0_i32_0 = arith.constant 0 : i32
    return %arg0, %c0_i32 : i32, i32
  }
}

</mosaic_0001>

<llo_original>
// kernel: tpu_custom_call.1
$region0: #{tpu_custom_call.1}
  #allocation0 [shape = 'u32[]', space=smem, size = 0x4, offset = 0x4, fixed_abs, tag = 'smem constant byte address 0x4 - core index']
  #allocation1 [shape = 'u32[144,128]{1,0:T(1,128)}', space=vmem, size = 0x12000, scoped, tag = 'internal scratch']
  %s0 = inlined_call_operand.hbm [shape: f32[16,32], index: 0, kind: input, shape index: {}]
  %s1 = inlined_call_operand.vmem [shape: f32[1,32], index: 1, kind: input, shape index: {}]
  %s2 = inlined_call_operand.hbm [shape: f32[16,32], index: 2, kind: output, shape index: {}]
  %s3 = sld [smem:[#allocation0]]
  $region22: #{tpu_custom_call.1} parent=0
    _
  %s5 = ssub.s32 1, %s3
  %s6 = scalar_select 0, %s5, %s3
  $region1: #{tpu_custom_call.1} parent=0
    #allocation2 [shape = 'u8[8192]{0}', space=vmem, size = 0x2000, scoped, tag = 'input window, operand 0, single buffered']
    #allocation3 [shape = 's32[1]{0}', space=sflag, size = 0x4, scoped, tag = 'scoped memory for tpu_custom_call.1']
    #allocation4 [shape = 's32[1]{0}', space=sflag, size = 0x4, scoped, tag = 'scoped memory for tpu_custom_call.1']
    #allocation5 [shape = 'u8[8192]{0}', space=vmem, size = 0x2000, scoped, tag = 'output window, operand 0, single buffered']
    %7 = vsyncpa [#allocation3], 0
    %8 = vsyncpa [#allocation4], 0
    // Predicated region
    $region2: #{tpu_custom_call.1} parent=1 // pred_check
      _
    $region3: #{tpu_custom_call.1} parent=1 // pred_check_branch
      %10 = sbr.rel (0) target = $region5
    $region4: #{tpu_custom_call.1} parent=1 // pred_region
      %s12 = ssub.s32 256, 256
      %13 = vsyncadd [#allocation3], %s12
      %s14 = sshll.u32 [#allocation2], 4
      %s15 = int_to_ptr.vmem [resolvable:$true] %s14
      %20 = dma.hbm_to_vmem [thread:$0]  %s0, 256, %s15, [#allocation3], 128, 128, 8
    $region5: #{tpu_custom_call.1} parent=1 // pred_fallthru
      _
    // Predicated region
    $region6: #{tpu_custom_call.1} parent=1 // pred_check
      _
    $region7: #{tpu_custom_call.1} parent=1 // pred_check_branch
      %22 = sbr.rel (0) target = $region9
    $region8: #{tpu_custom_call.1} parent=1 // pred_region
      _
    $region9: #{tpu_custom_call.1} parent=1 // pred_fallthru
      _
    // Predicated region
    $region10: #{tpu_custom_call.1} parent=1 // pred_check
      _
    $region11: #{tpu_custom_call.1} parent=1 // pred_check_branch
      %24 = sbr.rel (0) target = $region13
    $region12: #{tpu_custom_call.1} parent=1 // pred_region
      %25 = dma.done [#allocation3], 256
    $region13: #{tpu_custom_call.1} parent=1 // pred_fallthru
      _
    %v26 = vld [vmem:[%s1] sm:$0x1]
    %v27 = vld [vmem:[#allocation2] sm:$0xff]
    %v28 = vld [vmem:[#allocation2 + $0x8] sm:$0xff]
    %v29 = vmul.f32 %v27, %v27
    %v30 = vmul.f32 %v28, %v28
    %vm31 = vcmask 261120
    %v32 = vsel %vm31, %v29, 0.0
    %33 = vadd.xlane.f32.xlu0 %v32
    %v34 = vpop.xlane.xlu0 %33
    %v35 = vsel %vm31, %v30, 0.0
    %36 = vadd.xlane.f32.xlu0 %v35
    %v37 = vpop.xlane.xlu0 %36
    %v38 = vrcp.pop 32.0
    %v39 = vmul.f32 %v34, %v38
    %v40 = vmul.f32 %v37, %v38
    %v41 = vadd.f32 %v39, 1e-06
    %v42 = vadd.f32 %v40, 1e-06
    %v43 = vrsqrt.pop %v41
    %v44 = vrsqrt.pop %v42
    %v45 = vmul.f32 %v27, %v43
    %v46 = vmul.f32 %v28, %v44
    %v48 = vlaneseq
    %v49 = vshrl.u32 %v48, 7
    %v50 = vsub.s32 0, %v49
    %v51 = vrot.slane %v26, %v50
    %v53 = vmul.f32 %v45, %v51
    %v54 = vmul.f32 %v46, %v51
    %55 = vst.msk [vmem:[#allocation5] sm:$0xff] %vm31, %v53
    %56 = vst.msk [vmem:[#allocation5 + $0x8] sm:$0xff] %vm31, %v54
    // Predicated region
    $region14: #{tpu_custom_call.1} parent=1 // pred_check
      _
    $region15: #{tpu_custom_call.1} parent=1 // pred_check_branch
      %58 = sbr.rel (0) target = $region17
    $region16: #{tpu_custom_call.1} parent=1 // pred_region
      %s60 = ssub.s32 256, 256
      %61 = vsyncadd [#allocation4], %s60
      %s62 = sshll.u32 [#allocation5], 4
      %s63 = int_to_ptr.vmem [resolvable:$true] %s62
      %68 = dma.vmem_to_hbm [thread:$0]  %s63, 256, %s2, [#allocation4], 128, 128, 8
    $region17: #{tpu_custom_call.1} parent=1 // pred_fallthru
      _
    // Predicated region
    $region18: #{tpu_custom_call.1} parent=1 // pred_check
      _
    $region19: #{tpu_custom_call.1} parent=1 // pred_check_branch
      %70 = sbr.rel (0) target = $region21
    $region20: #{tpu_custom_call.1} parent=1 // pred_region
      %71 = dma.done [#allocation4], 256
    $region21: #{tpu_custom_call.1} parent=1 // pred_fallthru
      _
    %72 = vsyncpa [#allocation3], 1
    %73 = vsyncpa [#allocation4], 1

</llo_original>
